<compile_context>
chip_gen: v7x
topology: tpu7x:2x2x1
jax: 0.10.0
libtpu: 0.0.40
codegen_flags: <defaults>
</compile_context>

<pallas_src>
import functools

import numpy as np
import jax
import jax.numpy as jnp
from jax.experimental import pallas as pl
from jax.experimental.pallas import tpu as pltpu


def _make_tap_masks(h, w):
    """(9, H*W) validity mask for each 3x3 tap (taps in row-major a, b order)."""
    i = np.arange(h)[:, None]
    j = np.arange(w)[None, :]
    masks = []
    for a in range(3):
        for b in range(3):
            da, db = a - 1, b - 1
            valid = (i + da >= 0) & (i + da < h) & (j + db >= 0) & (j + db < w)
            masks.append(valid.astype(np.float32).reshape(h * w))
    return np.stack(masks, axis=0)


def _pick_batch_block(n, c_in, c_out, hw, itemsize):
    """Images per grid step.

    Large enough that per-step streamed bytes amortize the ~0.35 us / ~600-cycle
    grid-step overhead; small enough that double-buffered in/out blocks plus the
    im2col scratch stay well under the v7x 32 MiB scoped-VMEM default; keeps
    >= 2 grid steps when N >= 2 (2 TensorCores on v7x); and divides N so there
    is no ragged final block.
    """
    per_img = (c_in + c_out) * hw * itemsize            # streamed bytes / image
    target = 512 * 1024                                 # ~0.5 MiB / step
    b = max(1, min(n, (target + per_img - 1) // per_img))
    vmem_cap = 24 << 20                                 # headroom under 32 MiB
    while b > 1 and 2 * b * per_img + 9 * c_in * hw * 4 > vmem_cap:
        b -= 1
    while b > 1 and -(-n // b) < 2:                     # keep >= 2 grid steps
        b -= 1
    while b > 1 and n % b != 0:                         # no ragged final block
        b -= 1
    return b


def _dw_pw_relu_kernel(x_ref, wf_ref, mask_ref, o_ref, im2col_ref, *,
                       width, hw, c_in, b_blk):
    # x_ref:      (B_blk, C_in, HW)  input images (lane axis = H*W)
    # wf_ref:     (C_out, 9*C_in)    fused depthwise*pointwise weight (resident)
    # mask_ref:   (9, HW)            per-tap border-validity mask (resident)
    # o_ref:      (B_blk, C_out, HW) output images (lane-dense)
    # im2col_ref: (9*C_in, HW)       VMEM scratch: stacked shifted+masked slabs
    wf = wf_ref[...]                                    # load constants once
    masks = mask_ref[...]
    for b in range(b_blk):                              # static unroll, B_blk small
        x = x_ref[b]                                    # (C_in, HW)
        # Centre tap (a=1, b=1): mask is all ones -> straight copy, no mul.
        im2col_ref[4 * c_in:5 * c_in, :] = x
        for a in range(3):
            for c in range(3):
                k = a * 3 + c
                if k == 4:
                    continue
                d = (a - 1) * width + (c - 1)           # flat spatial offset of tap
                # shifted[p] = x[(p + d) mod HW]; wrapped positions zeroed by mask
                shifted = pltpu.roll(x, shift=(-d) % hw, axis=1)
                im2col_ref[k * c_in:(k + 1) * c_in, :] = shifted * masks[k:k + 1, :]
        # Single MXU matmul over K = 9*C_in, f32 accumulate, fused ReLU.
        acc = jnp.dot(wf, im2col_ref[...], preferred_element_type=jnp.float32)
        o_ref[b] = jnp.maximum(acc, 0.0).astype(o_ref.dtype)


@functools.partial(jax.jit, static_argnames=("compute_dtype",))
def inverse_conv_dw_forward(x_nchw, w_dw, w_pw, *, compute_dtype=None):
    """Forward of inverse_conv_dw.

    x_nchw: (N, C_in, H, W)        f32
    w_dw:   (C_in, 1, 3, 3)        PyTorch depthwise Conv2d weight (groups=C_in)
    w_pw:   (C_out, C_in, 1, 1)    PyTorch pointwise Conv2d weight
    compute_dtype: optional streaming/compute dtype (e.g. jnp.bfloat16 on
                   v6e/v7x for the mem-bound regime); None keeps x's dtype.
    returns (N, C_out, H, W)       x's dtype
    """
    n, c_in, h, w = x_nchw.shape
    c_out = w_pw.shape[0]
    hw = h * w
    out_dtype = x_nchw.dtype
    cdt = jnp.dtype(compute_dtype) if compute_dtype is not None else x_nchw.dtype

    x_flat = x_nchw.reshape(n, c_in, hw).astype(cdt)    # free reshape, NCHW-native
    wdw = w_dw.reshape(c_in, 9).astype(jnp.float32)     # (C_in, 9), taps row-major
    wpw = w_pw.reshape(c_out, c_in).astype(jnp.float32)
    # W_fused[o, k*C_in + c] = w_pw[o, c] * w_dw[c, k]  (matches im2col scratch layout)
    wf = (wpw[:, None, :] * wdw.T[None, :, :]).reshape(c_out, 9 * c_in).astype(cdt)
    masks = jnp.asarray(_make_tap_masks(h, w), dtype=cdt)   # static (9, HW) constant

    b_blk = _pick_batch_block(n, c_in, c_out, hw, x_flat.dtype.itemsize)
    grid = (n // b_blk,)

    kernel = functools.partial(_dw_pw_relu_kernel,
                               width=w, hw=hw, c_in=c_in, b_blk=b_blk)

    out_flat = pl.pallas_call(
        kernel,
        out_shape=jax.ShapeDtypeStruct((n, c_out, hw), out_dtype),
        grid_spec=pltpu.PrefetchScalarGridSpec(
            num_scalar_prefetch=0,
            grid=grid,                                   # B_blk images per step
            in_specs=[
                pl.BlockSpec((b_blk, c_in, hw), lambda i: (i, 0, 0)),
                pl.BlockSpec((c_out, 9 * c_in), lambda i: (0, 0)),   # resident
                pl.BlockSpec((9, hw), lambda i: (0, 0)),             # resident
            ],
            out_specs=pl.BlockSpec((b_blk, c_out, hw), lambda i: (i, 0, 0)),
            scratch_shapes=[pltpu.VMEM((9 * c_in, hw), cdt)],        # im2col slab
        ),
        compiler_params=pltpu.CompilerParams(
            dimension_semantics=("parallel",),
        ),
    )(x_flat, wf, masks)

    return out_flat.reshape(n, c_out, h, w)              # free reshape back to NCHW


if __name__ == "__main__":
    key = jax.random.PRNGKey(0)
    k_x, k_dw, k_pw = jax.random.split(key, 3)

    N, C_IN, C_OUT, H, W = 2, 4, 8, 16, 16

    x = jax.random.normal(k_x, (N, C_IN, H, W), dtype=jnp.float32)
    # PyTorch Conv2d weight layouts: depthwise (C_in, 1, 3, 3), pointwise (C_out, C_in, 1, 1)
    w_dw = jax.random.normal(k_dw, (C_IN, 1, 3, 3), dtype=jnp.float32) * 0.2
    w_pw = jax.random.normal(k_pw, (C_OUT, C_IN, 1, 1), dtype=jnp.float32) * 0.2

    out = inverse_conv_dw_forward(x, w_dw, w_pw)
    out = jax.block_until_ready(out)

    # Pure-JAX reference: depthwise 3x3 (pad 1, groups=C_in) -> 1x1 -> ReLU.
    ref_dw = jax.lax.conv_general_dilated(
        x, w_dw, window_strides=(1, 1), padding=((1, 1), (1, 1)),
        dimension_numbers=("NCHW", "OIHW", "NCHW"),
        feature_group_count=C_IN)
    ref = jnp.maximum(
        jnp.einsum("nchw,oc->nohw", ref_dw, w_pw.reshape(C_OUT, C_IN)), 0.0)

    assert out.shape == (N, C_OUT, H, W)
    assert jnp.allclose(out, ref, atol=1e-4, rtol=1e-4), float(jnp.max(jnp.abs(out - ref)))

    print("KERNEL_OK")
</pallas_src>

<mosaic_0001>
module attributes {stable_mosaic.version = 11 : i64} {
  func.func @_dw_pw_relu_kernel(%arg0: i32, %arg1: memref<1x4x256xf32, #tpu.memory_space<vmem>>, %arg2: memref<8x36xf32, #tpu.memory_space<vmem>>, %arg3: memref<9x256xf32, #tpu.memory_space<vmem>>, %arg4: memref<1x8x256xf32, #tpu.memory_space<vmem>>, %arg5: memref<36x256xf32, #tpu.memory_space<vmem>>) attributes {dimension_semantics = [#tpu.dimension_semantics<parallel>], iteration_bounds = array<i64: 2>, scalar_prefetch = 0 : i64, scratch_operands = 1 : i64, tpu.core_type = #tpu.core_type<tc>, window_params = [{transform_indices = @transform_0, window_bounds = array<i64: 1, 4, 256>}, {pipeline_mode = #tpu.pipeline_mode<synchronous>, transform_indices = @transform_1, window_bounds = array<i64: 8, 36>}, {pipeline_mode = #tpu.pipeline_mode<synchronous>, transform_indices = @transform_2, window_bounds = array<i64: 9, 256>}, {transform_indices = @transform_3, window_bounds = array<i64: 1, 8, 256>}]} {
    %c0 = arith.constant 0 : index
    %c0_0 = arith.constant 0 : index
    %0 = vector.load %arg2[%c0, %c0_0] : memref<8x36xf32, #tpu.memory_space<vmem>>, vector<8x36xf32>
    %c0_1 = arith.constant 0 : index
    %c0_2 = arith.constant 0 : index
    %1 = vector.load %arg3[%c0_1, %c0_2] : memref<9x256xf32, #tpu.memory_space<vmem>>, vector<9x256xf32>
    %c0_3 = arith.constant 0 : index
    %c0_4 = arith.constant 0 : index
    %c0_5 = arith.constant 0 : index
    %2 = vector.load %arg1[%c0_3, %c0_4, %c0_5] : memref<1x4x256xf32, #tpu.memory_space<vmem>>, vector<1x4x256xf32>
    %3 = vector.shape_cast %2 : vector<1x4x256xf32> to vector<4x256xf32>
    %c16 = arith.constant 16 : index
    %c0_6 = arith.constant 0 : index
    %4 = vector.load %arg5[%c16, %c0_6] : memref<36x256xf32, #tpu.memory_space<vmem>>, vector<4x256xf32>
    tpu.vector_store %arg5[%c16, %c0_6], %3 {strides = array<i32>} : memref<36x256xf32, #tpu.memory_space<vmem>>, vector<4x256xf32>,
    %c17_i32 = arith.constant 17 : i32
    %5 = tpu.dynamic_rotate %3 by %c17_i32 dim 1 : vector<4x256xf32>, i32 -> vector<4x256xf32>
    %6 = vector.extract_strided_slice %1 {offsets = [0, 0], sizes = [1, 256], strides = [1, 1]} : vector<9x256xf32> to vector<1x256xf32>
    %7 = vector.broadcast %6 : vector<1x256xf32> to vector<4x256xf32>
    %8 = arith.mulf %5, %7 : vector<4x256xf32>
    %c0_7 = arith.constant 0 : index
    %c0_8 = arith.constant 0 : index
    %9 = vector.load %arg5[%c0_7, %c0_8] : memref<36x256xf32, #tpu.memory_space<vmem>>, vector<4x256xf32>
    tpu.vector_store %arg5[%c0_7, %c0_8], %8 {strides = array<i32>} : memref<36x256xf32, #tpu.memory_space<vmem>>, vector<4x256xf32>,
    %c16_i32 = arith.constant 16 : i32
    %10 = tpu.dynamic_rotate %3 by %c16_i32 dim 1 : vector<4x256xf32>, i32 -> vector<4x256xf32>
    %11 = vector.extract_strided_slice %1 {offsets = [1, 0], sizes = [1, 256], strides = [1, 1]} : vector<9x256xf32> to vector<1x256xf32>
    %12 = vector.broadcast %11 : vector<1x256xf32> to vector<4x256xf32>
    %13 = arith.mulf %10, %12 : vector<4x256xf32>
    %c4 = arith.constant 4 : index
    %c0_9 = arith.constant 0 : index
    %14 = vector.load %arg5[%c4, %c0_9] : memref<36x256xf32, #tpu.memory_space<vmem>>, vector<4x256xf32>
    tpu.vector_store %arg5[%c4, %c0_9], %13 {strides = array<i32>} : memref<36x256xf32, #tpu.memory_space<vmem>>, vector<4x256xf32>,
    %c15_i32 = arith.constant 15 : i32
    %15 = tpu.dynamic_rotate %3 by %c15_i32 dim 1 : vector<4x256xf32>, i32 -> vector<4x256xf32>
    %16 = vector.extract_strided_slice %1 {offsets = [2, 0], sizes = [1, 256], strides = [1, 1]} : vector<9x256xf32> to vector<1x256xf32>
    %17 = vector.broadcast %16 : vector<1x256xf32> to vector<4x256xf32>
    %18 = arith.mulf %15, %17 : vector<4x256xf32>
    %c8 = arith.constant 8 : index
    %c0_10 = arith.constant 0 : index
    %19 = vector.load %arg5[%c8, %c0_10] : memref<36x256xf32, #tpu.memory_space<vmem>>, vector<4x256xf32>
    tpu.vector_store %arg5[%c8, %c0_10], %18 {strides = array<i32>} : memref<36x256xf32, #tpu.memory_space<vmem>>, vector<4x256xf32>,
    %c1_i32 = arith.constant 1 : i32
    %20 = tpu.dynamic_rotate %3 by %c1_i32 dim 1 : vector<4x256xf32>, i32 -> vector<4x256xf32>
    %21 = vector.extract_strided_slice %1 {offsets = [3, 0], sizes = [1, 256], strides = [1, 1]} : vector<9x256xf32> to vector<1x256xf32>
    %22 = vector.broadcast %21 : vector<1x256xf32> to vector<4x256xf32>
    %23 = arith.mulf %20, %22 : vector<4x256xf32>
    %c12 = arith.constant 12 : index
    %c0_11 = arith.constant 0 : index
    %24 = vector.load %arg5[%c12, %c0_11] : memref<36x256xf32, #tpu.memory_space<vmem>>, vector<4x256xf32>
    tpu.vector_store %arg5[%c12, %c0_11], %23 {strides = array<i32>} : memref<36x256xf32, #tpu.memory_space<vmem>>, vector<4x256xf32>,
    %c255_i32 = arith.constant 255 : i32
    %25 = tpu.dynamic_rotate %3 by %c255_i32 dim 1 : vector<4x256xf32>, i32 -> vector<4x256xf32>
    %26 = vector.extract_strided_slice %1 {offsets = [5, 0], sizes = [1, 256], strides = [1, 1]} : vector<9x256xf32> to vector<1x256xf32>
    %27 = vector.broadcast %26 : vector<1x256xf32> to vector<4x256xf32>
    %28 = arith.mulf %25, %27 : vector<4x256xf32>
    %c20 = arith.constant 20 : index
    %c0_12 = arith.constant 0 : index
    %29 = vector.load %arg5[%c20, %c0_12] : memref<36x256xf32, #tpu.memory_space<vmem>>, vector<4x256xf32>
    tpu.vector_store %arg5[%c20, %c0_12], %28 {strides = array<i32>} : memref<36x256xf32, #tpu.memory_space<vmem>>, vector<4x256xf32>,
    %c241_i32 = arith.constant 241 : i32
    %30 = tpu.dynamic_rotate %3 by %c241_i32 dim 1 : vector<4x256xf32>, i32 -> vector<4x256xf32>
    %31 = vector.extract_strided_slice %1 {offsets = [6, 0], sizes = [1, 256], strides = [1, 1]} : vector<9x256xf32> to vector<1x256xf32>
    %32 = vector.broadcast %31 : vector<1x256xf32> to vector<4x256xf32>
    %33 = arith.mulf %30, %32 : vector<4x256xf32>
    %c24 = arith.constant 24 : index
    %c0_13 = arith.constant 0 : index
    %34 = vector.load %arg5[%c24, %c0_13] : memref<36x256xf32, #tpu.memory_space<vmem>>, vector<4x256xf32>
    tpu.vector_store %arg5[%c24, %c0_13], %33 {strides = array<i32>} : memref<36x256xf32, #tpu.memory_space<vmem>>, vector<4x256xf32>,
    %c240_i32 = arith.constant 240 : i32
    %35 = tpu.dynamic_rotate %3 by %c240_i32 dim 1 : vector<4x256xf32>, i32 -> vector<4x256xf32>
    %36 = vector.extract_strided_slice %1 {offsets = [7, 0], sizes = [1, 256], strides = [1, 1]} : vector<9x256xf32> to vector<1x256xf32>
    %37 = vector.broadcast %36 : vector<1x256xf32> to vector<4x256xf32>
    %38 = arith.mulf %35, %37 : vector<4x256xf32>
    %c28 = arith.constant 28 : index
    %c0_14 = arith.constant 0 : index
    %39 = vector.load %arg5[%c28, %c0_14] : memref<36x256xf32, #tpu.memory_space<vmem>>, vector<4x256xf32>
    tpu.vector_store %arg5[%c28, %c0_14], %38 {strides = array<i32>} : memref<36x256xf32, #tpu.memory_space<vmem>>, vector<4x256xf32>,
    %c239_i32 = arith.constant 239 : i32
    %40 = tpu.dynamic_rotate %3 by %c239_i32 dim 1 : vector<4x256xf32>, i32 -> vector<4x256xf32>
    %41 = vector.extract_strided_slice %1 {offsets = [8, 0], sizes = [1, 256], strides = [1, 1]} : vector<9x256xf32> to vector<1x256xf32>
    %42 = vector.broadcast %41 : vector<1x256xf32> to vector<4x256xf32>
    %43 = arith.mulf %40, %42 : vector<4x256xf32>
    %c32 = arith.constant 32 : index
    %c0_15 = arith.constant 0 : index
    %44 = vector.load %arg5[%c32, %c0_15] : memref<36x256xf32, #tpu.memory_space<vmem>>, vector<4x256xf32>
    tpu.vector_store %arg5[%c32, %c0_15], %43 {strides = array<i32>} : memref<36x256xf32, #tpu.memory_space<vmem>>, vector<4x256xf32>,
    %c0_16 = arith.constant 0 : index
    %c0_17 = arith.constant 0 : index
    %45 = vector.load %arg5[%c0_16, %c0_17] : memref<36x256xf32, #tpu.memory_space<vmem>>, vector<36x256xf32>
    %cst = arith.constant dense<0.000000e+00> : vector<8x256xf32>
    %46 = tpu.matmul %0, %45, %cst {dimension_numbers = #tpu.dot_dimension_numbers<[1], [0], [0], [1], [0, 0, 1, 1], [], []>} : vector<8x36xf32>, vector<36x256xf32>, vector<8x256xf32> -> vector<8x256xf32>
    %cst_18 = arith.constant 0.000000e+00 : f32
    %47 = vector.broadcast %cst_18 : f32 to vector<8x256xf32>
    %48 = arith.maximumf %46, %47 : vector<8x256xf32>
    %c0_19 = arith.constant 0 : index
    %c0_20 = arith.constant 0 : index
    %c0_21 = arith.constant 0 : index
    %49 = vector.load %arg4[%c0_19, %c0_20, %c0_21] : memref<1x8x256xf32, #tpu.memory_space<vmem>>, vector<1x8x256xf32>
    %50 = vector.shape_cast %49 : vector<1x8x256xf32> to vector<8x256xf32>
    %51 = vector.shape_cast %48 : vector<8x256xf32> to vector<1x8x256xf32>
    tpu.vector_store %arg4[%c0_19, %c0_20, %c0_21], %51 {strides = array<i32>} : memref<1x8x256xf32, #tpu.memory_space<vmem>>, vector<1x8x256xf32>,
    return
  }
  func.func @transform_0(%arg0: i32) -> (i32, i32, i32) {
    %c0_i32 = arith.constant 0 : i32
    %c0_i32_0 = arith.constant 0 : i32
    %c0_i32_1 = arith.constant 0 : i32
    return %arg0, %c0_i32, %c0_i32_0 : i32, i32, i32
  }
  func.func @transform_1(%arg0: i32) -> (i32, i32) {
    %c0_i32 = arith.constant 0 : i32
    %c0_i32_0 = arith.constant 0 : i32
    %c0_i32_1 = arith.constant 0 : i32
    return %c0_i32, %c0_i32_0 : i32, i32
  }
  func.func @transform_2(%arg0: i32) -> (i32, i32) {
    %c0_i32 = arith.constant 0 : i32
    %c0_i32_0 = arith.constant 0 : i32
    %c0_i32_1 = arith.constant 0 : i32
    return %c0_i32, %c0_i32_0 : i32, i32
  }
  func.func @transform_3(%arg0: i32) -> (i32, i32, i32) {
    %c0_i32 = arith.constant 0 : i32
    %c0_i32_0 = arith.constant 0 : i32
    %c0_i32_1 = arith.constant 0 : i32
    return %arg0, %c0_i32, %c0_i32_0 : i32, i32, i32
  }
}

</mosaic_0001>

<llo_original>
// kernel: inverse_conv_dw_forward.1
$region0: #{inverse_conv_dw_forward.1}
  #allocation0 [shape = 'u32[]', space=smem, size = 0x4, offset = 0x4, fixed_abs, tag = 'smem constant byte address 0x4 - core index']
  #allocation1 [shape = 'u32[144,128]{1,0:T(1,128)}', space=vmem, size = 0x12000, scoped, tag = 'internal scratch']
  #allocation2 [shape = 'f32[36,256]{1,0:T(8,128)}', space=vmem, size = 0xa000, scoped, tag = 'scratch operand']
  %s0 = inlined_call_operand.vmem [shape: f32[2,4,256], index: 0, kind: input, shape index: {}]
  %s1 = inlined_call_operand.vmem [shape: f32[8,36], index: 1, kind: input, shape index: {}]
  %s2 = inlined_call_operand.vmem [shape: f32[9,256], index: 2, kind: input, shape index: {}]
  %s3 = inlined_call_operand.vmem [shape: f32[2,8,256], index: 3, kind: output, shape index: {}]
  %s4 = sld [smem:[#allocation0]]
  $region45: #{inverse_conv_dw_forward.1} parent=0
    _
  %s6 = ssub.s32 1, %s4
  %s7 = scalar_select 0, %s6, %s4
  loop: start=0, step=1, limit=4
  $region2: #{inverse_conv_dw_forward.1} parent=0 // loop_pre_header
    _
  $region3: #{inverse_conv_dw_forward.1} parent=0 // loop_header
    %s9 = sphi 0, %s13
    %p10 = scmp.ge.s32.totalorder %s9, 4
    %s19 = sphi 0, %s21
    %s22 = sphi 0, %s19
    %s23 = sphi 0, %s22
    %s39 = sphi 0, %s23
    %s43 = sphi 0, %s43
    %s45 = sphi 0, %s43
    %s46 = sphi 0, %s45
    %s60 = sphi 0, %s46
    %s64 = sphi 0, %s64
    %s66 = sphi 0, %s64
    %s67 = sphi 0, %s66
    %s81 = sphi 0, %s67
    %s87 = sphi 0, %s89
    %s90 = sphi 0, %s87
    %s91 = sphi 0, %s90
    %s107 = sphi 0, %s91
  $region4: #{inverse_conv_dw_forward.1} parent=0 // loop_header_branch
    %12 = sbr.rel (%p10) target = $region8
  $region5: #{inverse_conv_dw_forward.1} parent=0 // loop_body
    %s14 = ssub.s32 %s9, 1
    %s15 = ssub.s32 %s9, 2
    %s16 = sadd.s32 %s9, 1
    %s17 = ssub.s32 %s9, %s16
    %p18 = scmp.eq.s32.totalorder %s17, 0
    %s20 = sadd.s32 %s19, 1
    %s21 = scalar_select %p18, %s19, %s20
    %p24 = pneg %p18
    %p25 = scmp.eq.s32.totalorder %s9, 1
    %p26 = por %p24, %p25
    %p27 = scmp.ne.s32.totalorder %s19, %s22
    %p28 = scmp.eq.s32.totalorder %s9, 0
    %p29 = por %p27, %p28
    %p30 = scmp.ne.s32.totalorder %s19, %s22
    %p31 = scmp.eq.s32.totalorder %s14, 1
    %p32 = por %p30, %p31
    %p33 = scmp.ne.s32.totalorder %s22, %s23
    %p34 = scmp.eq.s32.totalorder %s14, 0
    %p35 = por %p33, %p34
    %p36 = scmp.ne.s32.totalorder %s22, %s23
    %p37 = scmp.eq.s32.totalorder %s15, 1
    %p38 = por %p36, %p37
    %p40 = scmp.ne.s32.totalorder %s23, %s39
    %p41 = scmp.eq.s32.totalorder %s15, 0
    %p42 = por %p40, %p41
    %s44 = sadd.s32 %s43, 1
    %p47 = scmp.eq.s32.totalorder %s9, 1
    %p48 = scmp.ne.s32.totalorder %s43, %s45
    %p49 = scmp.eq.s32.totalorder %s9, 0
    %p50 = por %p48, %p49
    %p51 = scmp.ne.s32.totalorder %s43, %s45
    %p52 = scmp.eq.s32.totalorder %s14, 1
    %p53 = por %p51, %p52
    %p54 = scmp.ne.s32.totalorder %s45, %s46
    %p55 = scmp.eq.s32.totalorder %s14, 0
    %p56 = por %p54, %p55
    %p57 = scmp.ne.s32.totalorder %s45, %s46
    %p58 = scmp.eq.s32.totalorder %s15, 1
    %p59 = por %p57, %p58
    %p61 = scmp.ne.s32.totalorder %s46, %s60
    %p62 = scmp.eq.s32.totalorder %s15, 0
    %p63 = por %p61, %p62
    %s65 = sadd.s32 %s64, 1
    %p68 = scmp.eq.s32.totalorder %s9, 1
    %p69 = scmp.ne.s32.totalorder %s64, %s66
    %p70 = scmp.eq.s32.totalorder %s9, 0
    %p71 = por %p69, %p70
    %p72 = scmp.ne.s32.totalorder %s64, %s66
    %p73 = scmp.eq.s32.totalorder %s14, 1
    %p74 = por %p72, %p73
    %p75 = scmp.ne.s32.totalorder %s66, %s67
    %p76 = scmp.eq.s32.totalorder %s14, 0
    %p77 = por %p75, %p76
    %p78 = scmp.ne.s32.totalorder %s66, %s67
    %p79 = scmp.eq.s32.totalorder %s15, 1
    %p80 = por %p78, %p79
    %p82 = scmp.ne.s32.totalorder %s67, %s81
    %p83 = scmp.eq.s32.totalorder %s15, 0
    %p84 = por %p82, %p83
    %s85 = ssub.s32 %s9, %s16
    %p86 = scmp.eq.s32.totalorder %s85, 0
    %s88 = sadd.s32 %s87, 1
    %s89 = scalar_select %p86, %s87, %s88
    %p92 = pneg %p86
    %p93 = scmp.eq.s32.totalorder %s9, 1
    %p94 = por %p92, %p93
    %p95 = scmp.ne.s32.totalorder %s87, %s90
    %p96 = scmp.eq.s32.totalorder %s9, 0
    %p97 = por %p95, %p96
    %p98 = scmp.ne.s32.totalorder %s87, %s90
    %p99 = scmp.eq.s32.totalorder %s14, 1
    %p100 = por %p98, %p99
    %p101 = scmp.ne.s32.totalorder %s90, %s91
    %p102 = scmp.eq.s32.totalorder %s14, 0
    %p103 = por %p101, %p102
    %p104 = scmp.ne.s32.totalorder %s90, %s91
    %p105 = scmp.eq.s32.totalorder %s15, 1
    %p106 = por %p104, %p105
    %p108 = scmp.ne.s32.totalorder %s91, %s107
    %p109 = scmp.eq.s32.totalorder %s15, 0
    %p110 = por %p108, %p109
    %p111 = scmp.le.s32.totalorder 1, %s9
    %p112 = scmp.lt.s32.totalorder %s9, 3
    %p113 = pnand %p111, %p112
    %p114 = pneg %p113
    // Predicated region
    $region9: #{inverse_conv_dw_forward.1} parent=5 // pred_check
      _
    $region10: #{inverse_conv_dw_forward.1} parent=5 // pred_check_branch
      %116 = sbr.rel (%p113) target = $region12
    $region11: #{inverse_conv_dw_forward.1} parent=5 // pred_region
      %s117 = ssub.s32 %s9, 1
      // Predicated region
      $region13: #{inverse_conv_dw_forward.1} parent=11 // pred_check
        %p118 = pneg %p56
      $region14: #{inverse_conv_dw_forward.1} parent=11 // pred_check_branch
        %120 = sbr.rel (%p118) target = $region16
      $region15: #{inverse_conv_dw_forward.1} parent=11 // pred_region
        _
      $region16: #{inverse_conv_dw_forward.1} parent=11 // pred_fallthru
        _
      // Predicated region
      $region17: #{inverse_conv_dw_forward.1} parent=11 // pred_check
        %p121 = pneg %p77
      $region18: #{inverse_conv_dw_forward.1} parent=11 // pred_check_branch
        %123 = sbr.rel (%p121) target = $region20
      $region19: #{inverse_conv_dw_forward.1} parent=11 // pred_region
        _
      $region20: #{inverse_conv_dw_forward.1} parent=11 // pred_fallthru
        _
    $region12: #{inverse_conv_dw_forward.1} parent=5 // pred_fallthru
      _
    %p124 = scmp.lt.s32.totalorder %s9, 2
    // Predicated region
    $region21: #{inverse_conv_dw_forward.1} parent=5 // pred_check
      %p125 = pneg %p124
    $region22: #{inverse_conv_dw_forward.1} parent=5 // pred_check_branch
      %127 = sbr.rel (%p125) target = $region24
    $region23: #{inverse_conv_dw_forward.1} parent=5 // pred_region
      // Predicated region
      $region25: #{inverse_conv_dw_forward.1} parent=23 // pred_check
        %p128 = pneg %p29
      $region26: #{inverse_conv_dw_forward.1} parent=23 // pred_check_branch
        %130 = sbr.rel (%p128) target = $region28
      $region27: #{inverse_conv_dw_forward.1} parent=23 // pred_region
        %p131 = scmp.lt.s32.totalorder %s9, 1
        %s132 = scalar_select %p131, %s9, 1
        %s133 = smul.addr %s132, 2
        %s134 = smul.addr %s133, 4
        %s135 = scalar_lea.vmem %s0, %s134
      $region28: #{inverse_conv_dw_forward.1} parent=23 // pred_fallthru
        _
    $region24: #{inverse_conv_dw_forward.1} parent=5 // pred_fallthru
      _
    %p136 = scmp.le.s32.totalorder 1, %s9
    %p137 = scmp.lt.s32.totalorder %s9, 3
    %p138 = pnand %p136, %p137
    %p139 = pneg %p138
    // Predicated region
    $region29: #{inverse_conv_dw_forward.1} parent=5 // pred_check
      _
    $region30: #{inverse_conv_dw_forward.1} parent=5 // pred_check_branch
      %141 = sbr.rel (%p138) target = $region32
    $region31: #{inverse_conv_dw_forward.1} parent=5 // pred_region
      %s142 = ssub.s32 %s9, 1
      %p143 = scmp.lt.s32.totalorder %s14, 1
      %s144 = scalar_select %p143, %s14, 1
      %s145 = smul.addr %s144, 2
      %s146 = smul.addr %s145, 4
      %s147 = scalar_lea.vmem %s0, %s146
      %p148 = pneg %p35
      %p149 = pneg %p32
      %p150 = pneg %p56
      %p151 = pneg %p53
      %p152 = pneg %p77
      %p153 = pneg %p74
      %p154 = pneg %p103
      %p155 = pneg %p100
      %p156 = scmp.lt.s32.totalorder %s14, 1
      %s157 = scalar_select %p156, %s14, 1
      %s158 = smul.addr %s157, 2
      %s159 = smul.addr %s158, 8
      %s160 = scalar_lea.vmem %s3, %s159
      %p161 = scmp.lt.s32.totalorder %s14, 1
      %s162 = scalar_select %p161, %s14, 1
      %s163 = smul.addr %s162, 2
      %s164 = smul.addr %s163, 4
      %s165 = scalar_lea.vmem %s0, %s164
      %p166 = scmp.lt.s32.totalorder %s14, 1
      %s167 = scalar_select %p166, %s14, 1
      %s168 = smul.addr %s167, 2
      %s169 = smul.addr %s168, 8
      %s170 = scalar_lea.vmem %s3, %s169
      %v171 = vld [vmem:[%s1] sm:$0xff]
      %v172 = vld [vmem:[%s2] sm:$0xff]
      %v173 = vld [vmem:[%s2 + $0x8] sm:$0xff]
      %v174 = vld [vmem:[%s2 + $0x10] sm:$0x1]
      %v175 = vld [vmem:[%s2 + $0x18] sm:$0x1]
      %v176 = vld [vmem:[%s165] sm:$0xff]
      %v178 = vcombine.high %v176, %v176
      %180 = vst [vmem:[#allocation2 + $0x20] sm:$0xf] %v176
      %181 = vst [vmem:[#allocation2 + $0x28] sm:$0xf] %v178
      %182 = vrot.lane.b32.xlu0 %v176, 17
      %v183 = vpop.permute.xlu0 %182
      %184 = vrot.lane.b32.xlu0 %v178, 17
      %v185 = vpop.permute.xlu0 %184
      %v186 = vlaneseq
      %v187 = vand.u32 %v186, 127
      %vm188 = vcmp.lt.s32.totalorder %v187, 17
      %v189 = vsel %vm188, %v183, %v185
      %v190 = vsel %vm188, %v185, %v183
      %v191 = vlaneseq
      %v192 = vshrl.u32 %v191, 7
      %v193 = vsub.s32 0, %v192
      %v194 = vrot.slane %v172, %v193
      %v195 = vlaneseq
      %v196 = vshrl.u32 %v195, 7
      %v197 = vsub.s32 0, %v196
      %v198 = vrot.slane %v173, %v197
      %v199 = vmul.f32 %v190, %v194
      %v200 = vmul.f32 %v189, %v198
      %201 = vst [vmem:[#allocation2] sm:$0xf] %v199
      %202 = vst [vmem:[#allocation2 + $0x8] sm:$0xf] %v200
      %203 = vrot.lane.b32.xlu0 %v176, 16
      %v204 = vpop.permute.xlu0 %203
      %205 = vrot.lane.b32.xlu0 %v178, 16
      %v206 = vpop.permute.xlu0 %205
      %vm207 = vcmp.lt.s32.totalorder %v187, 16
      %v208 = vsel %vm207, %v204, %v206
      %v209 = vsel %vm207, %v206, %v204
      %v210 = vlaneseq
      %v211 = vshrl.u32 %v210, 7
      %v212 = vsub.s32 1, %v211
      %v213 = vrot.slane %v172, %v212
      %v214 = vlaneseq
      %v215 = vshrl.u32 %v214, 7
      %v216 = vsub.s32 1, %v215
      %v217 = vrot.slane %v173, %v216
      %v218 = vmul.f32 %v209, %v213
      %v219 = vmul.f32 %v208, %v217
      %v222 = vrot.slane %v218, 4
      %v223 = vrot.slane %v219, 4
      %226 = vst [vmem:[#allocation2] sm:$0xf0] %v222
      %227 = vst [vmem:[#allocation2 + $0x8] sm:$0xf0] %v223
      %228 = vrot.lane.b32.xlu0 %v176, 15
      %v229 = vpop.permute.xlu0 %228
      %230 = vrot.lane.b32.xlu0 %v178, 15
      %v231 = vpop.permute.xlu0 %230
      %vm232 = vcmp.lt.s32.totalorder %v187, 15
      %v233 = vsel %vm232, %v229, %v231
      %v234 = vsel %vm232, %v231, %v229
      %v235 = vlaneseq
      %v236 = vshrl.u32 %v235, 7
      %v237 = vsub.s32 2, %v236
      %v238 = vrot.slane %v172, %v237
      %v239 = vlaneseq
      %v240 = vshrl.u32 %v239, 7
      %v241 = vsub.s32 2, %v240
      %v242 = vrot.slane %v173, %v241
      %v243 = vmul.f32 %v234, %v238
      %v244 = vmul.f32 %v233, %v242
      %245 = vst [vmem:[#allocation2 + $0x10] sm:$0xf] %v243
      %246 = vst [vmem:[#allocation2 + $0x18] sm:$0xf] %v244
      %247 = vrot.lane.b32.xlu0 %v176, 1
      %v248 = vpop.permute.xlu0 %247
      %249 = vrot.lane.b32.xlu0 %v178, 1
      %v250 = vpop.permute.xlu0 %249
      %vm251 = vcmp.lt.s32.totalorder %v187, 1
      %v252 = vsel %vm251, %v248, %v250
      %v253 = vsel %vm251, %v250, %v248
      %v254 = vlaneseq
      %v255 = vshrl.u32 %v254, 7
      %v256 = vsub.s32 3, %v255
      %v257 = vrot.slane %v172, %v256
      %v258 = vlaneseq
      %v259 = vshrl.u32 %v258, 7
      %v260 = vsub.s32 3, %v259
      %v261 = vrot.slane %v173, %v260
      %v262 = vmul.f32 %v253, %v257
      %v263 = vmul.f32 %v252, %v261
      %v266 = vrot.slane %v262, 4
      %v267 = vrot.slane %v263, 4
      %270 = vst [vmem:[#allocation2 + $0x10] sm:$0xf0] %v266
      %271 = vst [vmem:[#allocation2 + $0x18] sm:$0xf0] %v267
      %272 = vrot.lane.b32.xlu0 %v176, 127
      %v273 = vpop.permute.xlu0 %272
      %274 = vrot.lane.b32.xlu0 %v178, 127
      %v275 = vpop.permute.xlu0 %274
      %vm276 = vcmp.lt.s32.totalorder %v187, 127
      %v277 = vsel %vm276, %v273, %v275
      %v278 = vsel %vm276, %v275, %v273
      %v279 = vlaneseq
      %v280 = vshrl.u32 %v279, 7
      %v281 = vsub.s32 5, %v280
      %v282 = vrot.slane %v172, %v281
      %v283 = vlaneseq
      %v284 = vshrl.u32 %v283, 7
      %v285 = vsub.s32 5, %v284
      %v286 = vrot.slane %v173, %v285
      %v287 = vmul.f32 %v277, %v282
      %v288 = vmul.f32 %v278, %v286
      %v291 = vrot.slane %v287, 4
      %v292 = vrot.slane %v288, 4
      %295 = vst [vmem:[#allocation2 + $0x20] sm:$0xf0] %v291
      %296 = vst [vmem:[#allocation2 + $0x28] sm:$0xf0] %v292
      %297 = vrot.lane.b32.xlu0 %v176, 113
      %v298 = vpop.permute.xlu0 %297
      %299 = vrot.lane.b32.xlu0 %v178, 113
      %v300 = vpop.permute.xlu0 %299
      %vm301 = vcmp.lt.s32.totalorder %v187, 113
      %v302 = vsel %vm301, %v298, %v300
      %v303 = vsel %vm301, %v300, %v298
      %v304 = vlaneseq
      %v305 = vshrl.u32 %v304, 7
      %v306 = vsub.s32 6, %v305
      %v307 = vrot.slane %v172, %v306
      %v308 = vlaneseq
      %v309 = vshrl.u32 %v308, 7
      %v310 = vsub.s32 6, %v309
      %v311 = vrot.slane %v173, %v310
      %v312 = vmul.f32 %v302, %v307
      %v313 = vmul.f32 %v303, %v311
      %314 = vst [vmem:[#allocation2 + $0x30] sm:$0xf] %v312
      %315 = vst [vmem:[#allocation2 + $0x38] sm:$0xf] %v313
      %316 = vrot.lane.b32.xlu0 %v176, 112
      %v317 = vpop.permute.xlu0 %316
      %318 = vrot.lane.b32.xlu0 %v178, 112
      %v319 = vpop.permute.xlu0 %318
      %vm320 = vcmp.lt.s32.totalorder %v187, 112
      %v321 = vsel %vm320, %v317, %v319
      %v322 = vsel %vm320, %v319, %v317
      %v323 = vlaneseq
      %v324 = vshrl.u32 %v323, 7
      %v325 = vsub.s32 7, %v324
      %v326 = vrot.slane %v172, %v325
      %v327 = vlaneseq
      %v328 = vshrl.u32 %v327, 7
      %v329 = vsub.s32 7, %v328
      %v330 = vrot.slane %v173, %v329
      %v331 = vmul.f32 %v321, %v326
      %v332 = vmul.f32 %v322, %v330
      %v335 = vrot.slane %v331, 4
      %v336 = vrot.slane %v332, 4
      %339 = vst [vmem:[#allocation2 + $0x30] sm:$0xf0] %v335
      %340 = vst [vmem:[#allocation2 + $0x38] sm:$0xf0] %v336
      %341 = vrot.lane.b32.xlu0 %v176, 111
      %v342 = vpop.permute.xlu0 %341
      %343 = vrot.lane.b32.xlu0 %v178, 111
      %v344 = vpop.permute.xlu0 %343
      %vm345 = vcmp.lt.s32.totalorder %v187, 111
      %v346 = vsel %vm345, %v342, %v344
      %v347 = vsel %vm345, %v344, %v342
      %v348 = vlaneseq
      %v349 = vshrl.u32 %v348, 7
      %v350 = vsub.s32 0, %v349
      %v351 = vrot.slane %v174, %v350
      %v352 = vlaneseq
      %v353 = vshrl.u32 %v352, 7
      %v354 = vsub.s32 0, %v353
      %v355 = vrot.slane %v175, %v354
      %v356 = vmul.f32 %v346, %v351
      %v357 = vmul.f32 %v347, %v355
      %358 = vst [vmem:[#allocation2 + $0x40] sm:$0xf] %v356
      %359 = vst [vmem:[#allocation2 + $0x48] sm:$0xf] %v357
      %v360 = vld [vmem:[#allocation2] sm:$0xff]
      %v361 = vld [vmem:[#allocation2 + $0x8] sm:$0xff]
      %v362 = vld [vmem:[#allocation2 + $0x10] sm:$0xff]
      %v363 = vld [vmem:[#allocation2 + $0x18] sm:$0xff]
      %v364 = vld [vmem:[#allocation2 + $0x20] sm:$0xff]
      %v365 = vld [vmem:[#allocation2 + $0x28] sm:$0xff]
      %v366 = vld [vmem:[#allocation2 + $0x30] sm:$0xff]
      %v367 = vld [vmem:[#allocation2 + $0x38] sm:$0xff]
      %v368 = vld [vmem:[#allocation2 + $0x40] sm:$0xf]
      %v369 = vld [vmem:[#allocation2 + $0x48] sm:$0xf]
      %vm370 = vcmask 293888
      %v372 = vsel %vm370, %v171, 0
      %vm374 = vcmask 1043456
      %v376 = vsel %vm374, %v368, 0
      %v379 = vsel %vm374, %v369, 0
      %381 = vmatprep.subr.mxu0 %v361
      %382 = vmatpush1.msra.mxu0 %v360
      %383 = vmatprep.subr.mxu0 %v363
      %384 = vmatpush1.msra.mxu0 %v362
      %385 = vmatprep.subr.mxu0 %v365
      %386 = vmatpush1.msra.mxu0 %v364
      %387 = vmatprep.subr.mxu0 %v367
      %388 = vmatpush1.msra.mxu0 %v366
      %389 = vmatprep.subr.mxu0 %v379
      %390 = vmatpush1.msra.mxu0 %v376
      %391 = vmatprep.subr.mxu0 0.0
      %392 = vmatpush1.msra.mxu0 0.0
      %393 = vmatprep.subr.mxu0 0.0
      %394 = vmatpush1.msra.mxu0 0.0
      %395 = vmatprep.subr.mxu0 0.0
      %396 = vmatpush1.msra.mxu0 0.0
      %397 = vmatprep.subr.mxu0 0.0
      %398 = vmatpush1.msra.mxu0 0.0
      %399 = vmatprep.subr.mxu0 0.0
      %400 = vmatpush1.msra.mxu0 0.0
      %401 = vmatprep.subr.mxu0 0.0
      %402 = vmatpush1.msra.mxu0 0.0
      %403 = vmatprep.subr.mxu0 0.0
      %404 = vmatpush1.msra.mxu0 0.0
      %405 = vmatprep.subr.mxu0 0.0
      %406 = vmatpush1.msra.mxu0 0.0
      %407 = vmatprep.subr.mxu0 0.0
      %408 = vmatpush1.msra.mxu0 0.0
      %409 = vmatprep.subr.mxu0 0.0
      %410 = vmatpush1.msra.mxu0 0.0
      %411 = vmatprep.subr.mxu0 0.0
      %412 = vmatpush1.msra.mxu0 0.0
      %413 = vmatprep.subr.mxu0 0.0
      %414 = vmatpush1.msra.mxu0 0.0
      %415 = vmatprep.subr.mxu0 0.0
      %416 = vmatpush1.msra.mxu0 0.0
      %417 = vmatprep.subr.mxu0 0.0
      %418 = vmatpush1.msra.mxu0 0.0
      %419 = vmatprep.subr.mxu0 0.0
      %420 = vmatpush1.msra.mxu0 0.0
      %421 = vmatprep.subr.mxu0 0.0
      %422 = vmatpush1.msra.mxu0 0.0
      %423 = vmatprep.subr.mxu0 0.0
      %424 = vmatpush1.msra.mxu0 0.0
      %425 = vmatprep.subr.mxu0 0.0
      %426 = vmatpush1.msra.mxu0 0.0
      %427 = vmatprep.subr.mxu0 0.0
      %428 = vmatpush1.msra.mxu0 0.0
      %429 = vmatprep.subr.mxu0 0.0
      %430 = vmatpush1.msra.mxu0 0.0
      %431 = vmatprep.subr.mxu0 0.0
      %432 = vmatpush1.msra.mxu0 0.0
      %433 = vmatprep.subr.mxu0 0.0
      %434 = vmatpush1.msra.mxu0 0.0
      %435 = vmatprep.subr.mxu0 0.0
      %436 = vmatpush1.msra.mxu0 0.0
      %437 = vmatprep.subr.mxu0 0.0
      %438 = vmatpush1.msra.mxu0 0.0
      %439 = vmatprep.subr.mxu0 0.0
      %440 = vmatpush1.msra.mxu0 0.0
      %441 = vmatprep.subr.mxu0 0.0
      %442 = vmatpush1.msra.mxu0 0.0
      %443 = vmatprep.subr.mxu0 0.0
      %444 = vmatpush1.msra.mxu0 0.0
      %445 = vmatprep.mubr.f32.mxu0 0.0
      %446 = vmatmul.mubr.f32.gmra.mrb[0].mxu0 %v372
      %v447 = vpop.f32.mrb[0].mxu0
      %v448 = vadd.f32 0.0, %v447
      %v449 = vpop.f32.mrb[0].mxu0
      %v450 = vadd.f32 0.0, %v449
      %451 = vdwg.mxu0
      %v452 = vmax.f32 %v448, 0.0
      %v453 = vmax.f32 %v450, 0.0
      %454 = vst [vmem:[%s170] sm:$0xff] %v452
      %455 = vst [vmem:[%s170 + $0x8] sm:$0xff] %v453
      %p456 = scmp.lt.s32.totalorder %s14, 1
      %s457 = scalar_select %p456, %s14, 1
      %s458 = smul.addr %s457, 2
      %s459 = smul.addr %s458, 8
      %s460 = scalar_lea.vmem %s3, %s459
      // Predicated region
      $region33: #{inverse_conv_dw_forward.1} parent=31 // pred_check
        %p461 = pneg %p100
      $region34: #{inverse_conv_dw_forward.1} parent=31 // pred_check_branch
        %463 = sbr.rel (%p461) target = $region36
      $region35: #{inverse_conv_dw_forward.1} parent=31 // pred_region
        _
      $region36: #{inverse_conv_dw_forward.1} parent=31 // pred_fallthru
        _
    $region32: #{inverse_conv_dw_forward.1} parent=5 // pred_fallthru
      _
    %p464 = scmp.le.s32.totalorder 2, %s9
    // Predicated region
    $region37: #{inverse_conv_dw_forward.1} parent=5 // pred_check
      %p465 = pneg %p464
    $region38: #{inverse_conv_dw_forward.1} parent=5 // pred_check_branch
      %467 = sbr.rel (%p465) target = $region40
    $region39: #{inverse_conv_dw_forward.1} parent=5 // pred_region
      %s468 = ssub.s32 %s9, 2
      // Predicated region
      $region41: #{inverse_conv_dw_forward.1} parent=39 // pred_check
        %p469 = pneg %p106
      $region42: #{inverse_conv_dw_forward.1} parent=39 // pred_check_branch
        %471 = sbr.rel (%p469) target = $region44
      $region43: #{inverse_conv_dw_forward.1} parent=39 // pred_region
        %p472 = scmp.lt.s32.totalorder %s15, 1
        %s473 = scalar_select %p472, %s15, 1
        %s474 = smul.addr %s473, 2
        %s475 = smul.addr %s474, 8
        %s476 = scalar_lea.vmem %s3, %s475
      $region44: #{inverse_conv_dw_forward.1} parent=39 // pred_fallthru
        _
    $region40: #{inverse_conv_dw_forward.1} parent=5 // pred_fallthru
      _
  $region6: #{inverse_conv_dw_forward.1} parent=0 // loop_footer
    %s13 = sadd.s32 1, %s9
  $region7: #{inverse_conv_dw_forward.1} parent=0 // loop_footer_branch
    %8 = sbr.rel target = $region3
  $region8: #{inverse_conv_dw_forward.1} parent=0 // loop_exit
    _

</llo_original>
